<compile_context>
chip_gen: v5e
topology: v5e:2x2
jax: 0.10.0
libtpu: 0.0.40
codegen_flags: <defaults>
</compile_context>

<pallas_src>
import math

import jax
import jax.numpy as jnp
from jax import lax
from jax.experimental import pallas as pl
from jax.experimental.pallas import tpu as pltpu


def _round_up(x, m):
    return (x + m - 1) // m * m


def _cdiv(a, b):
    return (a + b - 1) // b


def _tpu_defaults():
    """Per-generation tiling / VMEM-limit defaults (robust to non-TPU tracing)."""
    kind = ""
    try:
        kind = jax.devices()[0].device_kind.lower()
    except Exception:
        pass
    vmem_cap = None
    try:
        vmem_cap = int(pltpu.get_tpu_info().vmem_capacity_bytes)
    except Exception:
        pass
    if "v7" in kind:
        # 64 MiB VMEM per TC, 2 TensorCores -> smaller tiles, >=2 grid steps.
        cfg = dict(batch_tile=256, min_grid=2, fallback_cap=64 << 20, frac=0.625)
    elif "v6" in kind or "v5" in kind:
        # 128 MiB VMEM, 1 TC -> big tiles amortize the ~0.35us per-step overhead.
        cfg = dict(batch_tile=512, min_grid=1, fallback_cap=128 << 20, frac=0.75)
    else:
        cfg = dict(batch_tile=256, min_grid=1, fallback_cap=64 << 20, frac=0.75)
    cap = vmem_cap if vmem_cap else cfg["fallback_cap"]
    cfg["vmem_limit"] = int(cap * cfg["frac"])
    return cfg


def _mlp_kernel(x_ref, w1_ref, b1_ref, w2_ref, b2_ref, o_ref):
    # fc1: (TB, in_p) @ (in_p, hid_p) -- bf16 MXU inputs, f32 accumulation.
    h = jnp.dot(x_ref[...], w1_ref[...], preferred_element_type=jnp.float32)
    h = h + b1_ref[...]

    # Exact erf GELU (matches torch.nn.GELU default); kept in f32.
    h = 0.5 * h * (1.0 + lax.erf(h * (1.0 / math.sqrt(2.0))))

    # drop1 -> identity in eval mode.

    # fc2: cast the hidden activation to bf16 in-registers and feed the MXU
    # directly (no f32 VMEM scratch round-trip), f32 accumulation.
    y = jnp.dot(h.astype(jnp.bfloat16), w2_ref[...],
                preferred_element_type=jnp.float32)
    y = y + b2_ref[...]

    # drop2 -> identity in eval mode.
    o_ref[...] = y.astype(o_ref.dtype)


def prepare_mlp_params(w1, b1, w2, b2):
    """Pad weights to lane-dense shapes (multiples of 128) and cast to bf16.

    Call ONCE at init and reuse across forward calls (avoids re-reading the
    f32 weights from HBM on every call). Zero padding is a mathematical no-op
    for this MLP: padded input cols hit zero weight rows, padded hidden cols
    are exactly 0 (GELU(0)=0) and hit zero fc2 rows, padded output cols are
    sliced off.

    w1: (in, hidden), b1: (hidden,), w2: (hidden, out), b2: (out,).
    """
    in_f, hid = w1.shape
    out_f = w2.shape[1]
    in_p, hid_p, out_p = (_round_up(d, 128) for d in (in_f, hid, out_f))

    def pad_w(w, r, c):
        w = w.astype(jnp.bfloat16)
        if w.shape == (r, c):
            return w
        return jnp.zeros((r, c), jnp.bfloat16).at[:w.shape[0], :w.shape[1]].set(w)

    def pad_b(b, c):
        b = b.astype(jnp.float32)
        if b.shape[0] == c:
            return b.reshape(1, c)
        return jnp.zeros((1, c), jnp.float32).at[0, :b.shape[0]].set(b)

    return dict(
        w1=pad_w(w1, in_p, hid_p), b1=pad_b(b1, hid_p),
        w2=pad_w(w2, hid_p, out_p), b2=pad_b(b2, out_p),
        in_features=in_f, hidden_features=hid, out_features=out_f)


def mlp_forward(x, params, *, batch_tile=None, vmem_limit_bytes=None):
    """x: (..., in_features); params from prepare_mlp_params.
    Returns (..., out_features) in x.dtype."""
    defaults = _tpu_defaults()
    if batch_tile is None:
        batch_tile = defaults["batch_tile"]
    if vmem_limit_bytes is None:
        vmem_limit_bytes = defaults["vmem_limit"]
    min_grid = defaults["min_grid"]

    in_f = params["in_features"]
    out_f = params["out_features"]
    w1p, b1p, w2p, b2p = params["w1"], params["b1"], params["w2"], params["b2"]
    in_p, hid_p = w1p.shape
    out_p = w2p.shape[1]

    orig_shape = x.shape
    assert orig_shape[-1] == in_f, "last dim of x must equal in_features"
    x2 = x.reshape(-1, in_f)
    B = x2.shape[0]
    out_dtype = x.dtype
    out_bytes = jnp.dtype(out_dtype).itemsize

    # --- adaptive batch tile (bounds last-tile waste) -----------------------
    n_tiles = _cdiv(B, batch_tile)
    if B > 8:
        n_tiles = max(n_tiles, min_grid)   # give both v7x TensorCores work
    TB = _round_up(_cdiv(B, n_tiles), 8)

    def vmem_estimate(tb):
        # weights/biases double-buffered by the pipeline + activation/output
        # double buffers + the live f32/bf16 hidden activation.
        w_bytes = 2 * (in_p * hid_p + hid_p * out_p) * 2 + 2 * (hid_p + out_p) * 4
        act = 2 * tb * in_p * 2
        out = 2 * tb * out_p * out_bytes
        hidden = tb * hid_p * (4 + 2)
        return w_bytes + act + out + hidden

    while TB > 8 and vmem_estimate(TB) > int(0.9 * vmem_limit_bytes):
        TB = _round_up(TB // 2, 8)

    B_p = _round_up(B, TB)
    grid = (B_p // TB,)

    # --- activation pad/cast (skipped entirely when already aligned) --------
    if B == B_p and in_f == in_p:
        xp = x2.astype(jnp.bfloat16)
    else:
        xp = jnp.zeros((B_p, in_p), jnp.bfloat16).at[:B, :in_f].set(
            x2.astype(jnp.bfloat16))

    cost = pl.CostEstimate(
        flops=2 * B_p * (in_p * hid_p + hid_p * out_p),
        transcendentals=B_p * hid_p,
        bytes_accessed=(B_p * in_p * 2 + in_p * hid_p * 2 + hid_p * out_p * 2
                        + (hid_p + out_p) * 4 + B_p * out_p * out_bytes),
    )

    y_p = pl.pallas_call(
        _mlp_kernel,
        # Output written directly in the caller's dtype (no wrapper astype pass).
        out_shape=jax.ShapeDtypeStruct((B_p, out_p), out_dtype),
        grid_spec=pltpu.PrefetchScalarGridSpec(
            num_scalar_prefetch=0,
            grid=grid,
            in_specs=[
                # Activations: tiled over the batch grid axis (pipelined).
                pl.BlockSpec((TB, in_p), lambda i: (i, 0)),
                # Weights / biases: constant block index -> VMEM-resident.
                pl.BlockSpec((in_p, hid_p), lambda i: (0, 0)),
                pl.BlockSpec((1, hid_p), lambda i: (0, 0)),
                pl.BlockSpec((hid_p, out_p), lambda i: (0, 0)),
                pl.BlockSpec((1, out_p), lambda i: (0, 0)),
            ],
            out_specs=pl.BlockSpec((TB, out_p), lambda i: (i, 0)),
        ),
        compiler_params=pltpu.CompilerParams(
            # Batch tiles are independent -> "parallel" (2 TCs on v7x).
            dimension_semantics=("parallel",),
            vmem_limit_bytes=vmem_limit_bytes,
        ),
        cost_estimate=cost,
    )(xp, w1p, b1p, w2p, b2p)

    y = y_p[:B, :out_f]
    return y.reshape(*orig_shape[:-1], out_f)


def _init_linear(key, fan_in, fan_out):
    """Deterministic init mimicking nn.Linear defaults (uniform +/- 1/sqrt(fan_in)).
    Returns W of shape (fan_in, fan_out) (already transposed for x @ W) and b (fan_out,)."""
    kw, kb = jax.random.split(key)
    bound = 1.0 / math.sqrt(fan_in)
    w = jax.random.uniform(kw, (fan_in, fan_out), jnp.float32, -bound, bound)
    b = jax.random.uniform(kb, (fan_out,), jnp.float32, -bound, bound)
    return w, b


if __name__ == "__main__":
    # Small shapes consistent with the module: batch=32, in=32, hidden=64, out=32.
    B, IN_F, HID_F, OUT_F = 32, 32, 64, 32

    key = jax.random.PRNGKey(0)
    kx, k1, k2 = jax.random.split(key, 3)

    x = jax.random.normal(kx, (B, IN_F), jnp.float32)
    w1, b1 = _init_linear(k1, IN_F, HID_F)   # fc1: in -> hidden
    w2, b2 = _init_linear(k2, HID_F, OUT_F)  # fc2: hidden -> out

    # Pad + bf16-cast weights ONCE (hoisted out of the per-call path).
    params = prepare_mlp_params(w1, b1, w2, b2)

    # Small batch_tile just to exercise a multi-step pipelined grid at toy
    # shapes (grid = 4 here); per-generation defaults apply when omitted.
    y = mlp_forward(x, params, batch_tile=8)
    jax.block_until_ready(y)

    # Cross-check against a pure-f32 JAX reference of the same forward pass.
    # Tolerance is loosened (~2e-2) because the kernel uses bf16 MXU inputs
    # with f32 accumulation.
    h_ref = x @ w1 + b1
    h_ref = 0.5 * h_ref * (1.0 + lax.erf(h_ref / math.sqrt(2.0)))
    y_ref = h_ref @ w2 + b2
    assert y.shape == y_ref.shape, "shape mismatch vs reference"
    assert jnp.allclose(y, y_ref, atol=2e-2, rtol=2e-2), "mismatch vs reference"

    # Also exercise the default (generation-tuned) tiling path once.
    y2 = mlp_forward(x, params)
    jax.block_until_ready(y2)
    assert jnp.allclose(y2, y_ref, atol=2e-2, rtol=2e-2), "mismatch (default tile)"

    print("KERNEL_OK")
</pallas_src>

<mosaic_0001>
module attributes {stable_mosaic.version = 11 : i64} {
  func.func @_mlp_kernel(%arg0: i32, %arg1: memref<8x128xbf16, #tpu.memory_space<vmem>>, %arg2: memref<128x128xbf16, #tpu.memory_space<vmem>>, %arg3: memref<1x128xf32, #tpu.memory_space<vmem>>, %arg4: memref<128x128xbf16, #tpu.memory_space<vmem>>, %arg5: memref<1x128xf32, #tpu.memory_space<vmem>>, %arg6: memref<8x128xf32, #tpu.memory_space<vmem>>) attributes {dimension_semantics = [#tpu.dimension_semantics<parallel>], iteration_bounds = array<i64: 4>, scalar_prefetch = 0 : i64, scratch_operands = 0 : i64, tpu.core_type = #tpu.core_type<tc>, window_params = [{transform_indices = @transform_0, window_bounds = array<i64: 8, 128>}, {pipeline_mode = #tpu.pipeline_mode<synchronous>, transform_indices = @transform_1, window_bounds = array<i64: 128, 128>}, {pipeline_mode = #tpu.pipeline_mode<synchronous>, transform_indices = @transform_2, window_bounds = array<i64: 1, 128>}, {pipeline_mode = #tpu.pipeline_mode<synchronous>, transform_indices = @transform_3, window_bounds = array<i64: 128, 128>}, {pipeline_mode = #tpu.pipeline_mode<synchronous>, transform_indices = @transform_4, window_bounds = array<i64: 1, 128>}, {transform_indices = @transform_5, window_bounds = array<i64: 8, 128>}]} {
    %c0 = arith.constant 0 : index
    %c0_0 = arith.constant 0 : index
    %0 = vector.load %arg1[%c0, %c0_0] : memref<8x128xbf16, #tpu.memory_space<vmem>>, vector<8x128xbf16>
    %c0_1 = arith.constant 0 : index
    %c0_2 = arith.constant 0 : index
    %1 = vector.load %arg2[%c0_1, %c0_2] : memref<128x128xbf16, #tpu.memory_space<vmem>>, vector<128x128xbf16>
    %cst = arith.constant dense<0.000000e+00> : vector<8x128xf32>
    %2 = tpu.matmul %0, %1, %cst {dimension_numbers = #tpu.dot_dimension_numbers<[1], [0], [0], [1], [0, 0, 1, 1], [], []>} : vector<8x128xbf16>, vector<128x128xbf16>, vector<8x128xf32> -> vector<8x128xf32>
    %c0_3 = arith.constant 0 : index
    %c0_4 = arith.constant 0 : index
    %3 = vector.load %arg3[%c0_3, %c0_4] : memref<1x128xf32, #tpu.memory_space<vmem>>, vector<1x128xf32>
    %4 = vector.broadcast %3 : vector<1x128xf32> to vector<8x128xf32>
    %5 = arith.addf %2, %4 : vector<8x128xf32>
    %cst_5 = arith.constant 5.000000e-01 : f32
    %6 = vector.broadcast %cst_5 : f32 to vector<8x128xf32>
    %7 = arith.mulf %6, %5 : vector<8x128xf32>
    %cst_6 = arith.constant 0.707106769 : f32
    %8 = vector.broadcast %cst_6 : f32 to vector<8x128xf32>
    %9 = arith.mulf %5, %8 : vector<8x128xf32>
    %10 = math.erf %9 : vector<8x128xf32>
    %cst_7 = arith.constant 1.000000e+00 : f32
    %11 = vector.broadcast %cst_7 : f32 to vector<8x128xf32>
    %12 = arith.addf %11, %10 : vector<8x128xf32>
    %13 = arith.mulf %7, %12 : vector<8x128xf32>
    %14 = arith.truncf %13 : vector<8x128xf32> to vector<8x128xbf16>
    %c0_8 = arith.constant 0 : index
    %c0_9 = arith.constant 0 : index
    %15 = vector.load %arg4[%c0_8, %c0_9] : memref<128x128xbf16, #tpu.memory_space<vmem>>, vector<128x128xbf16>
    %cst_10 = arith.constant dense<0.000000e+00> : vector<8x128xf32>
    %16 = tpu.matmul %14, %15, %cst_10 {dimension_numbers = #tpu.dot_dimension_numbers<[1], [0], [0], [1], [0, 0, 1, 1], [], []>} : vector<8x128xbf16>, vector<128x128xbf16>, vector<8x128xf32> -> vector<8x128xf32>
    %c0_11 = arith.constant 0 : index
    %c0_12 = arith.constant 0 : index
    %17 = vector.load %arg5[%c0_11, %c0_12] : memref<1x128xf32, #tpu.memory_space<vmem>>, vector<1x128xf32>
    %18 = vector.broadcast %17 : vector<1x128xf32> to vector<8x128xf32>
    %19 = arith.addf %16, %18 : vector<8x128xf32>
    %c0_13 = arith.constant 0 : index
    %c0_14 = arith.constant 0 : index
    %20 = vector.load %arg6[%c0_13, %c0_14] : memref<8x128xf32, #tpu.memory_space<vmem>>, vector<8x128xf32>
    tpu.vector_store %arg6[%c0_13, %c0_14], %19 {strides = array<i32>} : memref<8x128xf32, #tpu.memory_space<vmem>>, vector<8x128xf32>,
    return
  }
  func.func @transform_0(%arg0: i32) -> (i32, i32) {
    %c0_i32 = arith.constant 0 : i32
    %c0_i32_0 = arith.constant 0 : i32
    return %arg0, %c0_i32 : i32, i32
  }
  func.func @transform_1(%arg0: i32) -> (i32, i32) {
    %c0_i32 = arith.constant 0 : i32
    %c0_i32_0 = arith.constant 0 : i32
    %c0_i32_1 = arith.constant 0 : i32
    return %c0_i32, %c0_i32_0 : i32, i32
  }
  func.func @transform_2(%arg0: i32) -> (i32, i32) {
    %c0_i32 = arith.constant 0 : i32
    %c0_i32_0 = arith.constant 0 : i32
    %c0_i32_1 = arith.constant 0 : i32
    return %c0_i32, %c0_i32_0 : i32, i32
  }
  func.func @transform_3(%arg0: i32) -> (i32, i32) {
    %c0_i32 = arith.constant 0 : i32
    %c0_i32_0 = arith.constant 0 : i32
    %c0_i32_1 = arith.constant 0 : i32
    return %c0_i32, %c0_i32_0 : i32, i32
  }
  func.func @transform_4(%arg0: i32) -> (i32, i32) {
    %c0_i32 = arith.constant 0 : i32
    %c0_i32_0 = arith.constant 0 : i32
    %c0_i32_1 = arith.constant 0 : i32
    return %c0_i32, %c0_i32_0 : i32, i32
  }
  func.func @transform_5(%arg0: i32) -> (i32, i32) {
    %c0_i32 = arith.constant 0 : i32
    %c0_i32_0 = arith.constant 0 : i32
    return %arg0, %c0_i32 : i32, i32
  }
}

</mosaic_0001>

<llo_original>
// kernel: tpu_custom_call.1
$region0: #{tpu_custom_call.1}
  #allocation0 [shape = 'u32[]', space=smem, size = 0x4, offset = 0x4, fixed_abs, tag = 'smem constant byte address 0x4 - core index']
  #allocation1 [shape = 'u32[72,128]{1,0:T(1,128)}', space=vmem, size = 0x9000, scoped, tag = 'internal scratch']
  %s0 = inlined_call_operand.hbm [shape: bf16[32,128], index: 0, kind: input, shape index: {}]
  %s1 = inlined_call_operand.hbm [shape: bf16[128,128], index: 1, kind: input, shape index: {}]
  %s2 = inlined_call_operand.vmem [shape: f32[1,128], index: 2, kind: input, shape index: {}]
  %s3 = inlined_call_operand.hbm [shape: bf16[128,128], index: 3, kind: input, shape index: {}]
  %s4 = inlined_call_operand.vmem [shape: f32[1,128], index: 4, kind: input, shape index: {}]
  %s5 = inlined_call_operand.hbm [shape: f32[32,128], index: 5, kind: output, shape index: {}]
  %s6 = sld [smem:[#allocation0]]
  $region65: #{tpu_custom_call.1} parent=0
    _
  %s8 = ssub.s32 1, %s6
  %s9 = scalar_select 0, %s8, %s6
  $region1: #{tpu_custom_call.1} parent=0
    #allocation2 [shape = 'u8[4096]{0}', space=vmem, size = 0x1000, scoped, tag = 'input window, operand 0']
    #allocation3 [shape = 's32[2]{0}', space=sflag, size = 0x8, scoped, tag = 'scoped memory for tpu_custom_call.1']
    #allocation4 [shape = 's32[2]{0}', space=sflag, size = 0x8, scoped, tag = 'scoped memory for tpu_custom_call.1']
    #allocation5 [shape = 'u8[32768]{0}', space=vmem, size = 0x8000, scoped, tag = 'input window, operand 1, single buffered']
    #allocation6 [shape = 's32[1]{0}', space=sflag, size = 0x4, scoped, tag = 'scoped memory for tpu_custom_call.1']
    #allocation7 [shape = 'u8[32768]{0}', space=vmem, size = 0x8000, scoped, tag = 'input window, operand 3, single buffered']
    #allocation8 [shape = 'u8[8192]{0}', space=vmem, size = 0x2000, scoped, tag = 'output window, operand 0']
    %10 = vsyncpa [#allocation3], 0
    %s11 = scalar_lea.sflag [#allocation3], 1
    %12 = vsyncpa %s11, 0
    %13 = vsyncpa [#allocation6], 0
    %14 = vsyncpa [#allocation4], 0
    %s15 = scalar_lea.sflag [#allocation4], 1
    %16 = vsyncpa %s15, 0
    loop: start=0, step=1, limit=6
    $region2: #{tpu_custom_call.1} parent=1 // loop_pre_header
      _
    $region3: #{tpu_custom_call.1} parent=1 // loop_header
      %s18 = sphi 0, %s22
      %p19 = scmp.ge.s32.totalorder %s18, 6
      %s28 = sphi 0, %s30
      %s31 = sphi 0, %s28
      %s32 = sphi 0, %s31
      %s48 = sphi 0, %s32
      %s52 = sphi 0, %s52
      %s54 = sphi 0, %s52
      %s55 = sphi 0, %s54
      %s69 = sphi 0, %s55
      %s73 = sphi 0, %s73
      %s75 = sphi 0, %s73
      %s76 = sphi 0, %s75
      %s90 = sphi 0, %s76
      %s94 = sphi 0, %s94
      %s96 = sphi 0, %s94
      %s97 = sphi 0, %s96
      %s111 = sphi 0, %s97
      %s115 = sphi 0, %s115
      %s117 = sphi 0, %s115
      %s118 = sphi 0, %s117
      %s132 = sphi 0, %s118
      %s138 = sphi 0, %s140
      %s141 = sphi 0, %s138
      %s142 = sphi 0, %s141
      %s158 = sphi 0, %s142
    $region4: #{tpu_custom_call.1} parent=1 // loop_header_branch
      %21 = sbr.rel (%p19) target = $region8
    $region5: #{tpu_custom_call.1} parent=1 // loop_body
      %s23 = ssub.s32 %s18, 1
      %s24 = ssub.s32 %s18, 2
      %s25 = sadd.s32 %s18, 1
      %s26 = ssub.s32 %s18, %s25
      %p27 = scmp.eq.s32.totalorder %s26, 0
      %s29 = sadd.s32 %s28, 1
      %s30 = scalar_select %p27, %s28, %s29
      %p33 = pneg %p27
      %p34 = scmp.eq.s32.totalorder %s18, 3
      %p35 = por %p33, %p34
      %p36 = scmp.ne.s32.totalorder %s28, %s31
      %p37 = scmp.eq.s32.totalorder %s18, 0
      %p38 = por %p36, %p37
      %p39 = scmp.ne.s32.totalorder %s28, %s31
      %p40 = scmp.eq.s32.totalorder %s23, 3
      %p41 = por %p39, %p40
      %p42 = scmp.ne.s32.totalorder %s31, %s32
      %p43 = scmp.eq.s32.totalorder %s23, 0
      %p44 = por %p42, %p43
      %p45 = scmp.ne.s32.totalorder %s31, %s32
      %p46 = scmp.eq.s32.totalorder %s24, 3
      %p47 = por %p45, %p46
      %p49 = scmp.ne.s32.totalorder %s32, %s48
      %p50 = scmp.eq.s32.totalorder %s24, 0
      %p51 = por %p49, %p50
      %s53 = sadd.s32 %s52, 1
      %p56 = scmp.eq.s32.totalorder %s18, 3
      %p57 = scmp.ne.s32.totalorder %s52, %s54
      %p58 = scmp.eq.s32.totalorder %s18, 0
      %p59 = por %p57, %p58
      %p60 = scmp.ne.s32.totalorder %s52, %s54
      %p61 = scmp.eq.s32.totalorder %s23, 3
      %p62 = por %p60, %p61
      %p63 = scmp.ne.s32.totalorder %s54, %s55
      %p64 = scmp.eq.s32.totalorder %s23, 0
      %p65 = por %p63, %p64
      %p66 = scmp.ne.s32.totalorder %s54, %s55
      %p67 = scmp.eq.s32.totalorder %s24, 3
      %p68 = por %p66, %p67
      %p70 = scmp.ne.s32.totalorder %s55, %s69
      %p71 = scmp.eq.s32.totalorder %s24, 0
      %p72 = por %p70, %p71
      %s74 = sadd.s32 %s73, 1
      %p77 = scmp.eq.s32.totalorder %s18, 3
      %p78 = scmp.ne.s32.totalorder %s73, %s75
      %p79 = scmp.eq.s32.totalorder %s18, 0
      %p80 = por %p78, %p79
      %p81 = scmp.ne.s32.totalorder %s73, %s75
      %p82 = scmp.eq.s32.totalorder %s23, 3
      %p83 = por %p81, %p82
      %p84 = scmp.ne.s32.totalorder %s75, %s76
      %p85 = scmp.eq.s32.totalorder %s23, 0
      %p86 = por %p84, %p85
      %p87 = scmp.ne.s32.totalorder %s75, %s76
      %p88 = scmp.eq.s32.totalorder %s24, 3
      %p89 = por %p87, %p88
      %p91 = scmp.ne.s32.totalorder %s76, %s90
      %p92 = scmp.eq.s32.totalorder %s24, 0
      %p93 = por %p91, %p92
      %s95 = sadd.s32 %s94, 1
      %p98 = scmp.eq.s32.totalorder %s18, 3
      %p99 = scmp.ne.s32.totalorder %s94, %s96
      %p100 = scmp.eq.s32.totalorder %s18, 0
      %p101 = por %p99, %p100
      %p102 = scmp.ne.s32.totalorder %s94, %s96
      %p103 = scmp.eq.s32.totalorder %s23, 3
      %p104 = por %p102, %p103
      %p105 = scmp.ne.s32.totalorder %s96, %s97
      %p106 = scmp.eq.s32.totalorder %s23, 0
      %p107 = por %p105, %p106
      %p108 = scmp.ne.s32.totalorder %s96, %s97
      %p109 = scmp.eq.s32.totalorder %s24, 3
      %p110 = por %p108, %p109
      %p112 = scmp.ne.s32.totalorder %s97, %s111
      %p113 = scmp.eq.s32.totalorder %s24, 0
      %p114 = por %p112, %p113
      %s116 = sadd.s32 %s115, 1
      %p119 = scmp.eq.s32.totalorder %s18, 3
      %p120 = scmp.ne.s32.totalorder %s115, %s117
      %p121 = scmp.eq.s32.totalorder %s18, 0
      %p122 = por %p120, %p121
      %p123 = scmp.ne.s32.totalorder %s115, %s117
      %p124 = scmp.eq.s32.totalorder %s23, 3
      %p125 = por %p123, %p124
      %p126 = scmp.ne.s32.totalorder %s117, %s118
      %p127 = scmp.eq.s32.totalorder %s23, 0
      %p128 = por %p126, %p127
      %p129 = scmp.ne.s32.totalorder %s117, %s118
      %p130 = scmp.eq.s32.totalorder %s24, 3
      %p131 = por %p129, %p130
      %p133 = scmp.ne.s32.totalorder %s118, %s132
      %p134 = scmp.eq.s32.totalorder %s24, 0
      %p135 = por %p133, %p134
      %s136 = ssub.s32 %s18, %s25
      %p137 = scmp.eq.s32.totalorder %s136, 0
      %s139 = sadd.s32 %s138, 1
      %s140 = scalar_select %p137, %s138, %s139
      %p143 = pneg %p137
      %p144 = scmp.eq.s32.totalorder %s18, 3
      %p145 = por %p143, %p144
      %p146 = scmp.ne.s32.totalorder %s138, %s141
      %p147 = scmp.eq.s32.totalorder %s18, 0
      %p148 = por %p146, %p147
      %p149 = scmp.ne.s32.totalorder %s138, %s141
      %p150 = scmp.eq.s32.totalorder %s23, 3
      %p151 = por %p149, %p150
      %p152 = scmp.ne.s32.totalorder %s141, %s142
      %p153 = scmp.eq.s32.totalorder %s23, 0
      %p154 = por %p152, %p153
      %p155 = scmp.ne.s32.totalorder %s141, %s142
      %p156 = scmp.eq.s32.totalorder %s24, 3
      %p157 = por %p155, %p156
      %p159 = scmp.ne.s32.totalorder %s142, %s158
      %p160 = scmp.eq.s32.totalorder %s24, 0
      %p161 = por %p159, %p160
      %p162 = scmp.le.s32.totalorder 1, %s18
      %p163 = scmp.lt.s32.totalorder %s18, 5
      %p164 = pnand %p162, %p163
      %p165 = pneg %p164
      // Predicated region
      $region9: #{tpu_custom_call.1} parent=5 // pred_check
        _
      $region10: #{tpu_custom_call.1} parent=5 // pred_check_branch
        %167 = sbr.rel (%p164) target = $region12
      $region11: #{tpu_custom_call.1} parent=5 // pred_region
        %s168 = ssub.s32 %s18, 1
        // Predicated region
        $region13: #{tpu_custom_call.1} parent=11 // pred_check
          %p169 = pneg %p65
        $region14: #{tpu_custom_call.1} parent=11 // pred_check_branch
          %171 = sbr.rel (%p169) target = $region16
        $region15: #{tpu_custom_call.1} parent=11 // pred_region
          %173 = vsyncadd [#allocation6], 0
          %s174 = sshll.u32 %s1, 4
          %s175 = int_to_ptr.hbm [resolvable:$true] %s174
          %s176 = sshll.u32 [#allocation5], 4
          %s177 = int_to_ptr.vmem [resolvable:$true] %s176
          %182 = dma.hbm_to_vmem [thread:$0]  %s175, 1024, %s177, [#allocation6], 64, 64, 4
        $region16: #{tpu_custom_call.1} parent=11 // pred_fallthru
          _
        // Predicated region
        $region17: #{tpu_custom_call.1} parent=11 // pred_check
          %p183 = pneg %p86
        $region18: #{tpu_custom_call.1} parent=11 // pred_check_branch
          %185 = sbr.rel (%p183) target = $region20
        $region19: #{tpu_custom_call.1} parent=11 // pred_region
          _
        $region20: #{tpu_custom_call.1} parent=11 // pred_fallthru
          _
        // Predicated region
        $region21: #{tpu_custom_call.1} parent=11 // pred_check
          %p186 = pneg %p107
        $region22: #{tpu_custom_call.1} parent=11 // pred_check_branch
          %188 = sbr.rel (%p186) target = $region24
        $region23: #{tpu_custom_call.1} parent=11 // pred_region
          %190 = vsyncadd [#allocation6], 0
          %s191 = sshll.u32 %s3, 4
          %s192 = int_to_ptr.hbm [resolvable:$true] %s191
          %s193 = sshll.u32 [#allocation7], 4
          %s194 = int_to_ptr.vmem [resolvable:$true] %s193
          %199 = dma.hbm_to_vmem [thread:$0]  %s192, 1024, %s194, [#allocation6], 64, 64, 4
        $region24: #{tpu_custom_call.1} parent=11 // pred_fallthru
          _
        // Predicated region
        $region25: #{tpu_custom_call.1} parent=11 // pred_check
          %p200 = pneg %p128
        $region26: #{tpu_custom_call.1} parent=11 // pred_check_branch
          %202 = sbr.rel (%p200) target = $region28
        $region27: #{tpu_custom_call.1} parent=11 // pred_region
          _
        $region28: #{tpu_custom_call.1} parent=11 // pred_fallthru
          _
      $region12: #{tpu_custom_call.1} parent=5 // pred_fallthru
        _
      %p203 = scmp.lt.s32.totalorder %s18, 4
      // Predicated region
      $region29: #{tpu_custom_call.1} parent=5 // pred_check
        %p204 = pneg %p203
      $region30: #{tpu_custom_call.1} parent=5 // pred_check_branch
        %206 = sbr.rel (%p204) target = $region32
      $region31: #{tpu_custom_call.1} parent=5 // pred_region
        // Predicated region
        $region33: #{tpu_custom_call.1} parent=31 // pred_check
          %p207 = pneg %p38
        $region34: #{tpu_custom_call.1} parent=31 // pred_check_branch
          %209 = sbr.rel (%p207) target = $region36
        $region35: #{tpu_custom_call.1} parent=31 // pred_region
          %s210 = sand.u32 %s28, 1
          %s211 = scalar_lea.sflag [#allocation3], %s210
          %s212 = sand.u32 %s28, 1
          %s213 = smul.addr %s212, 4
          %s214 = scalar_lea.vmem [#allocation2], %s213
          %216 = vsyncadd %s211, 0
          %s217 = smul.addr %s18, 4
          %s218 = scalar_lea.hbm %s0, %s217
          %s220 = sshll.u32 %s218, 4
          %s221 = int_to_ptr.hbm [resolvable:$true] %s220
          %s222 = sshll.u32 %s214, 4
          %s223 = int_to_ptr.vmem [resolvable:$true] %s222
          %225 = dma.hbm_to_vmem [thread:$0]  %s221, 64, %s223, %s211
        $region36: #{tpu_custom_call.1} parent=31 // pred_fallthru
          _
      $region32: #{tpu_custom_call.1} parent=5 // pred_fallthru
        _
      %p226 = scmp.le.s32.totalorder 1, %s18
      %p227 = scmp.lt.s32.totalorder %s18, 5
      %p228 = pnand %p226, %p227
      %p229 = pneg %p228
      // Predicated region
      $region37: #{tpu_custom_call.1} parent=5 // pred_check
        _
      $region38: #{tpu_custom_call.1} parent=5 // pred_check_branch
        %231 = sbr.rel (%p228) target = $region40
      $region39: #{tpu_custom_call.1} parent=5 // pred_region
        %s232 = ssub.s32 %s18, 1
        %s233 = sand.u32 %s31, 1
        %s234 = scalar_lea.sflag [#allocation3], %s233
        %s235 = sand.u32 %s31, 1
        %s236 = smul.addr %s235, 4
        %s237 = scalar_lea.vmem [#allocation2], %s236
        // Predicated region
        $region41: #{tpu_custom_call.1} parent=39 // pred_check
          %p238 = pneg %p44
        $region42: #{tpu_custom_call.1} parent=39 // pred_check_branch
          %240 = sbr.rel (%p238) target = $region44
        $region43: #{tpu_custom_call.1} parent=39 // pred_region
          %242 = dma.done %s234, 64
        $region44: #{tpu_custom_call.1} parent=39 // pred_fallthru
          _
        // Predicated region
        $region45: #{tpu_custom_call.1} parent=39 // pred_check
          %p243 = pneg %p65
        $region46: #{tpu_custom_call.1} parent=39 // pred_check_branch
          %245 = sbr.rel (%p243) target = $region48
        $region47: #{tpu_custom_call.1} parent=39 // pred_region
          %247 = dma.done [#allocation6], 1024
        $region48: #{tpu_custom_call.1} parent=39 // pred_fallthru
          _
        // Predicated region
        $region49: #{tpu_custom_call.1} parent=39 // pred_check
          %p248 = pneg %p107
        $region50: #{tpu_custom_call.1} parent=39 // pred_check_branch
          %250 = sbr.rel (%p248) target = $region52
        $region51: #{tpu_custom_call.1} parent=39 // pred_region
          %252 = dma.done [#allocation6], 1024
        $region52: #{tpu_custom_call.1} parent=39 // pred_fallthru
          _
        %s253 = sand.u32 %s31, 1
        %s254 = scalar_lea.sflag [#allocation3], %s253
        %s255 = sand.u32 %s31, 1
        %s256 = smul.addr %s255, 4
        %s257 = scalar_lea.vmem [#allocation2], %s256
        %p258 = pneg %p44
        %p259 = pneg %p41
        %p260 = pneg %p65
        %p261 = pneg %p62
        %p262 = pneg %p86
        %p263 = pneg %p83
        %p264 = pneg %p107
        %p265 = pneg %p104
        %p266 = pneg %p128
        %p267 = pneg %p125
        %p268 = pneg %p154
        %p269 = pneg %p151
        %s270 = sand.u32 %s141, 1
        %s271 = scalar_lea.sflag [#allocation4], %s270
        %s272 = sand.u32 %s141, 1
        %s273 = smul.addr %s272, 8
        %s274 = scalar_lea.vmem [#allocation8], %s273
        %v275 = vld [vmem:[%s237] sm:$0xf]
        %v276 = vld [vmem:[#allocation5] sm:$0xf]
        %v277 = vld [vmem:[#allocation5 + $0x4] sm:$0xf]
        %v278 = vld [vmem:[#allocation5 + $0x8] sm:$0xf]
        %v279 = vld [vmem:[#allocation5 + $0xc] sm:$0xf]
        %v280 = vld [vmem:[#allocation5 + $0x10] sm:$0xf]
        %v281 = vld [vmem:[#allocation5 + $0x14] sm:$0xf]
        %v282 = vld [vmem:[#allocation5 + $0x18] sm:$0xf]
        %v283 = vld [vmem:[#allocation5 + $0x1c] sm:$0xf]
        %v284 = vld [vmem:[#allocation5 + $0x20] sm:$0xf]
        %v285 = vld [vmem:[#allocation5 + $0x24] sm:$0xf]
        %v286 = vld [vmem:[#allocation5 + $0x28] sm:$0xf]
        %v287 = vld [vmem:[#allocation5 + $0x2c] sm:$0xf]
        %v288 = vld [vmem:[#allocation5 + $0x30] sm:$0xf]
        %v289 = vld [vmem:[#allocation5 + $0x34] sm:$0xf]
        %v290 = vld [vmem:[#allocation5 + $0x38] sm:$0xf]
        %v291 = vld [vmem:[#allocation5 + $0x3c] sm:$0xf]
        %v292 = vld [vmem:[%s2] sm:$0x1]
        %v294 = vperm.slane %v292, 0
        %v312 = vunpack.c.l.b16 %v276
        %v313 = vunpack.c.l.b16 %v277
        %v314 = vunpack.c.l.b16 %v278
        %v315 = vunpack.c.l.b16 %v279
        %v316 = vunpack.c.l.b16 %v280
        %v317 = vunpack.c.l.b16 %v281
        %v318 = vunpack.c.l.b16 %v282
        %v319 = vunpack.c.l.b16 %v283
        %v320 = vunpack.c.l.b16 %v284
        %v321 = vunpack.c.l.b16 %v285
        %v322 = vunpack.c.l.b16 %v286
        %v323 = vunpack.c.l.b16 %v287
        %v324 = vunpack.c.l.b16 %v288
        %v325 = vunpack.c.l.b16 %v289
        %v326 = vunpack.c.l.b16 %v290
        %v327 = vunpack.c.l.b16 %v291
        %v328 = vpack.c.b16 %v313, %v312
        %v329 = vpack.c.b16 %v315, %v314
        %v330 = vpack.c.b16 %v317, %v316
        %v331 = vpack.c.b16 %v319, %v318
        %v332 = vpack.c.b16 %v321, %v320
        %v333 = vpack.c.b16 %v323, %v322
        %v334 = vpack.c.b16 %v325, %v324
        %v335 = vpack.c.b16 %v327, %v326
        %344 = vmatpush.bf16.msra.mxu0 %v335
        %345 = vmatpush.bf16.msra.mxu0 %v334
        %346 = vmatpush.bf16.msra.mxu0 %v333
        %347 = vmatpush.bf16.msra.mxu0 %v332
        %348 = vmatpush.bf16.msra.mxu0 %v331
        %349 = vmatpush.bf16.msra.mxu0 %v330
        %350 = vmatpush.bf16.msra.mxu0 %v329
        %351 = vmatpush.bf16.msra.mxu0 %v328
        %352 = vmatmul.bf16.gmra.mxu0 %v275
        %v353 = vpop.f32.mrf.mxu0
        %v354 = vadd.f32 %v294, %v353
        %v355 = vpop.f32.mrf.mxu0
        %356 = vdwg.mxu0
        %v357 = vmul.f32 %v354, 0.5
        %v358 = vmul.f32 %v354, 0.70710677
        %v359 = vmul.f32 %v358, %v358
        %v360 = vmin.f32 16.0, %v359
        %v361 = vmul.f32 %v360, 2.1237322e-06
        %v362 = vadd.f32 %v361, 0.00028619796
        %v363 = vmul.f32 %v360, %v362
        %v364 = vadd.f32 %v363, 0.0036580483
        %v365 = vmul.f32 %v360, %v364
        %v366 = vadd.f32 %v365, 0.05243302
        %v367 = vmul.f32 %v360, %v366
        %v368 = vadd.f32 %v367, 0.18741608
        %v369 = vmul.f32 %v360, %v368
        %v370 = vadd.f32 %v369, 1.1283791
        %v371 = vmul.f32 %v358, %v370
        %v372 = vmul.f32 %v360, 3.8918573e-05
        %v373 = vadd.f32 %v372, 0.001143296
        %v374 = vmul.f32 %v360, %v373
        %v375 = vadd.f32 %v374, 0.014752088
        %v376 = vmul.f32 %v360, %v375
        %v377 = vadd.f32 %v376, 0.112945676
        %v378 = vmul.f32 %v360, %v377
        %v379 = vadd.f32 %v378, 0.4994258
        %v380 = vmul.f32 %v360, %v379
        %v381 = vadd.f32 %v380, 1.0
        %v382 = vrcp.pop %v381
        %v383 = vmul.f32 %v381, %v382
        %v384 = vsub.f32 1.0, %v383
        %v385 = vmul.f32 %v382, %v384
        %v386 = vadd.f32 %v382, %v385
        %vm387 = vweird.f32 %v381
        %vm388 = vweird.f32 %v382
        %vm389 = vmor %vm387, %vm388
        %v390 = vsel %vm389, %v382, %v386
        %v391 = vand.u32 2147483647, %v381
        %vm392 = vcmp.eq.f32.partialorder %v391, 8.507059e+37
        %v393 = vand.u32 %v381, 2147483648
        %v394 = vor.u32 1.1754944e-38, %v393
        %v395 = vsel %vm392, %v394, %v390
        %v396 = vmul.f32 %v371, %v395
        %v397 = vmin.f32 %v396, 1.0
        %v398 = vmax.f32 %v397, -1.0
        %v399 = vadd.f32 %v398, 1.0
        %v400 = vmul.f32 %v357, %v399
        %v401 = vpack.c.bf16 %v400, %v400
        %v402 = vld [vmem:[#allocation7] sm:$0xf]
        %v403 = vld [vmem:[#allocation7 + $0x4] sm:$0xf]
        %v404 = vld [vmem:[#allocation7 + $0x8] sm:$0xf]
        %v405 = vld [vmem:[#allocation7 + $0xc] sm:$0xf]
        %v406 = vld [vmem:[#allocation7 + $0x10] sm:$0xf]
        %v407 = vld [vmem:[#allocation7 + $0x14] sm:$0xf]
        %v408 = vld [vmem:[#allocation7 + $0x18] sm:$0xf]
        %v409 = vld [vmem:[#allocation7 + $0x1c] sm:$0xf]
        %v410 = vld [vmem:[#allocation7 + $0x20] sm:$0xf]
        %v411 = vld [vmem:[#allocation7 + $0x24] sm:$0xf]
        %v412 = vld [vmem:[#allocation7 + $0x28] sm:$0xf]
        %v413 = vld [vmem:[#allocation7 + $0x2c] sm:$0xf]
        %v414 = vld [vmem:[#allocation7 + $0x30] sm:$0xf]
        %v415 = vld [vmem:[#allocation7 + $0x34] sm:$0xf]
        %v416 = vld [vmem:[#allocation7 + $0x38] sm:$0xf]
        %v417 = vld [vmem:[#allocation7 + $0x3c] sm:$0xf]
        %v418 = vld [vmem:[%s4] sm:$0x1]
        %v420 = vperm.slane %v418, 0
        %v438 = vunpack.c.l.b16 %v402
        %v439 = vunpack.c.l.b16 %v403
        %v440 = vunpack.c.l.b16 %v404
        %v441 = vunpack.c.l.b16 %v405
        %v442 = vunpack.c.l.b16 %v406
        %v443 = vunpack.c.l.b16 %v407
        %v444 = vunpack.c.l.b16 %v408
        %v445 = vunpack.c.l.b16 %v409
        %v446 = vunpack.c.l.b16 %v410
        %v447 = vunpack.c.l.b16 %v411
        %v448 = vunpack.c.l.b16 %v412
        %v449 = vunpack.c.l.b16 %v413
        %v450 = vunpack.c.l.b16 %v414
        %v451 = vunpack.c.l.b16 %v415
        %v452 = vunpack.c.l.b16 %v416
        %v453 = vunpack.c.l.b16 %v417
        %v454 = vpack.c.b16 %v439, %v438
        %v455 = vpack.c.b16 %v441, %v440
        %v456 = vpack.c.b16 %v443, %v442
        %v457 = vpack.c.b16 %v445, %v444
        %v458 = vpack.c.b16 %v447, %v446
        %v459 = vpack.c.b16 %v449, %v448
        %v460 = vpack.c.b16 %v451, %v450
        %v461 = vpack.c.b16 %v453, %v452
        %470 = vmatpush.bf16.msra.mxu0 %v461
        %471 = vmatpush.bf16.msra.mxu0 %v460
        %472 = vmatpush.bf16.msra.mxu0 %v459
        %473 = vmatpush.bf16.msra.mxu0 %v458
        %474 = vmatpush.bf16.msra.mxu0 %v457
        %475 = vmatpush.bf16.msra.mxu0 %v456
        %476 = vmatpush.bf16.msra.mxu0 %v455
        %477 = vmatpush.bf16.msra.mxu0 %v454
        %478 = vmatmul.bf16.gmra.mxu0 %v401
        %v479 = vpop.f32.mrf.mxu0
        %v480 = vadd.f32 %v420, %v479
        %v481 = vpop.f32.mrf.mxu0
        %482 = vdwg.mxu0
        %483 = vst [vmem:[%s274] sm:$0xff] %v480
        %s484 = sand.u32 %s141, 1
        %s485 = scalar_lea.sflag [#allocation4], %s484
        %s486 = sand.u32 %s141, 1
        %s487 = smul.addr %s486, 8
        %s488 = scalar_lea.vmem [#allocation8], %s487
        // Predicated region
        $region53: #{tpu_custom_call.1} parent=39 // pred_check
          %p489 = pneg %p151
        $region54: #{tpu_custom_call.1} parent=39 // pred_check_branch
          %491 = sbr.rel (%p489) target = $region56
        $region55: #{tpu_custom_call.1} parent=39 // pred_region
          %493 = vsyncadd %s485, 0
          %s494 = smul.addr %s23, 8
          %s495 = scalar_lea.hbm %s5, %s494
          %s497 = sshll.u32 %s488, 4
          %s498 = int_to_ptr.vmem [resolvable:$true] %s497
          %s499 = sshll.u32 %s495, 4
          %s500 = int_to_ptr.hbm [resolvable:$true] %s499
          %502 = dma.vmem_to_hbm [thread:$0]  %s498, 128, %s500, %s485
        $region56: #{tpu_custom_call.1} parent=39 // pred_fallthru
          _
      $region40: #{tpu_custom_call.1} parent=5 // pred_fallthru
        _
      %p503 = scmp.le.s32.totalorder 2, %s18
      // Predicated region
      $region57: #{tpu_custom_call.1} parent=5 // pred_check
        %p504 = pneg %p503
      $region58: #{tpu_custom_call.1} parent=5 // pred_check_branch
        %506 = sbr.rel (%p504) target = $region60
      $region59: #{tpu_custom_call.1} parent=5 // pred_region
        %s507 = ssub.s32 %s18, 2
        // Predicated region
        $region61: #{tpu_custom_call.1} parent=59 // pred_check
          %p508 = pneg %p157
        $region62: #{tpu_custom_call.1} parent=59 // pred_check_branch
          %510 = sbr.rel (%p508) target = $region64
        $region63: #{tpu_custom_call.1} parent=59 // pred_region
          %s511 = sand.u32 %s142, 1
          %s512 = scalar_lea.sflag [#allocation4], %s511
          %s513 = sand.u32 %s142, 1
          %s514 = smul.addr %s513, 8
          %s515 = scalar_lea.vmem [#allocation8], %s514
          %517 = dma.done %s512, 128
        $region64: #{tpu_custom_call.1} parent=59 // pred_fallthru
          _
      $region60: #{tpu_custom_call.1} parent=5 // pred_fallthru
        _
    $region6: #{tpu_custom_call.1} parent=1 // loop_footer
      %s22 = sadd.s32 1, %s18
    $region7: #{tpu_custom_call.1} parent=1 // loop_footer_branch
      %17 = sbr.rel target = $region3
    $region8: #{tpu_custom_call.1} parent=1 // loop_exit
      _
    %518 = vsyncpa [#allocation3], 1
    %s519 = scalar_lea.sflag [#allocation3], 1
    %520 = vsyncpa %s519, 1
    %521 = vsyncpa [#allocation6], 1
    %522 = vsyncpa [#allocation4], 1
    %s523 = scalar_lea.sflag [#allocation4], 1
    %524 = vsyncpa %s523, 1

</llo_original>
